<compile_context>
chip_gen: v5e
topology: v5e:2x2
jax: 0.10.0
libtpu: 0.0.40
codegen_flags: <defaults>
</compile_context>

<pallas_src>
import functools
import numpy as np
import jax
import jax.numpy as jnp
from jax.experimental import pallas as pl
from jax.experimental.pallas import tpu as pltpu

# -----------------------------------------------------------------------------
# cfg / split definitions.
# TODO(synk): get_splits_and_inits / GaussianDecoder are external modules not given in the
# prompt; reconstructed with the standard opacity/scaling/rotation/feat_dc/feat_rest splits
# and sigmoid / exp*lambda / L2-normalize / identity activations.
CFG = dict(
    gaussians_per_pixel=2,
    max_sh_degree=1,
    opacity_scale=0.05, opacity_bias=-2.0,
    scale_scale=0.02,  scale_bias=-3.0,
    sh_scale=0.05,
    scale_lambda=1.0,
)


def get_splits_and_inits(cfg):
    split_dimensions = [1, 3, 4, 3]                      # opacity, scaling, rotation, feat_dc
    scales = [cfg["opacity_scale"], cfg["scale_scale"], 1.0, 5.0]
    biases = [cfg["opacity_bias"], cfg["scale_bias"], 0.0, 0.0]
    if cfg["max_sh_degree"] > 0:
        sh_rgb = ((cfg["max_sh_degree"] + 1) ** 2 - 1) * 3
        split_dimensions.append(sh_rgb)                  # feat_rest
        scales.append(cfg["sh_scale"])
        biases.append(0.0)
    return split_dimensions, scales, biases


# -----------------------------------------------------------------------------
# Deterministic parameter init (mirrors LinearHead.__init__ for a single head).
def _xavier_uniform(key, shape, gain):
    fan_out, fan_in = shape
    bound = gain * float(np.sqrt(6.0 / (fan_in + fan_out)))
    return jax.random.uniform(key, shape, jnp.float32, -bound, bound)


def init_params(key, in_dim, split_dims, scales, biases,
                scale_mul=1, n_heads=1, head_idx=0, xyz_scale=0.01, xyz_bias=0.0):
    kg, ko = jax.random.split(key)
    keys = jax.random.split(kg, len(split_dims))
    inv_idx = n_heads - head_idx
    w_blocks, b_blocks = [], []
    for feat_idx, (oc, sc, bs) in enumerate(zip(split_dims, scales, biases)):
        if feat_idx == 1:                                # scaling split gets the log(10*inv_idx) bump
            bs = bs + float(np.log(10 * inv_idx * scale_mul))
        w_blocks.append(_xavier_uniform(keys[feat_idx], (oc, in_dim), sc))
        b_blocks.append(jnp.full((oc,), bs, jnp.float32))
    wg = jnp.concatenate(w_blocks, axis=0)               # (C, D)  like nn.Linear.weight
    bg = jnp.concatenate(b_blocks, axis=0)               # (C,)
    wo = _xavier_uniform(ko, (3, in_dim), xyz_scale)     # (3, D)
    bo = jnp.full((3,), xyz_bias, jnp.float32)           # (3,)
    return wg, bg, wo, bo


# -----------------------------------------------------------------------------
# Pallas kernel: fused (gaussian + offset) Linear + decoder activations, one token tile.
def _linear_head_kernel(feat_ref, w_ref, b_ref, out_ref, *, splits, scale_lambda):
    x = feat_ref[0]                                      # (TN, D) in the input dtype (f32/bf16)

    # Single MXU pass for both heads; f32 accumulation; f32 bias added post-accumulation.
    g = jnp.dot(x, w_ref[...], preferred_element_type=jnp.float32) + b_ref[...]   # (TN, Ctot)

    # Static per-split channel boundaries.
    o1 = splits[0]
    s1 = o1 + splits[1]
    r1 = s1 + splits[2]
    ch = jax.lax.broadcasted_iota(jnp.int32, g.shape, dimension=1)
    opa_m = ch < o1
    scl_m = (ch >= o1) & (ch < s1)
    rot_m = (ch >= s1) & (ch < r1)

    # One EUP exp pass reused by both the sigmoid (opacity) and exp (scaling) branches.
    # The clamp keeps e finite so e * reciprocal(1 + e) cannot produce inf * 0 -> nan in
    # saturated / discarded select lanes (exp(80) ~ 5.5e34 < f32 max).
    e = jnp.exp(jnp.minimum(g, 80.0))
    sig = e * pl.reciprocal(1.0 + e, approx=True)        # EUP recip instead of a VALU divide

    # Rotation L2 normalization (F.normalize: eps=1e-12 on the norm == 1e-24 on the sq-sum).
    rot_sq_sum = jnp.sum(jnp.where(rot_m, g * g, 0.0), axis=-1, keepdims=True)     # (TN, 1)
    rot_inv = jax.lax.rsqrt(jnp.maximum(rot_sq_sum, 1e-24))

    act = jnp.where(opa_m, sig,                          # sigmoid   (opacity)
          jnp.where(scl_m, e * scale_lambda,             # exp * lam (scaling)
          jnp.where(rot_m, g * rot_inv,                  # L2-norm   (rotation)
                    g)))                                 # identity  (feat_dc / feat_rest / offset)
    out_ref[0] = act.astype(out_ref.dtype)


def _round_up(x, m):
    return ((x + m - 1) // m) * m


def linear_head_forward(feat, wg, bg, wo, bo, cfg, split_dims, *,
                        token_tile=4096, compute_dtype=None):
    """Fused LinearHead forward (single head).

    token_tile: token-dim block size.  Default 4096 keeps the double-buffered working set at
    a few MiB (safe under the 16/32 MiB default scoped VMEM on v5e/v6e/v7x).  Sweep larger
    (up to ~8192 on v7x, ~16384 on v6e with a raised vmem_limit_bytes) when HBM-bound.
    """
    if feat.ndim == 2:                                   # feat.unsqueeze(0) equivalent
        feat = feat[None]
    B, N, D = feat.shape
    C = int(sum(split_dims))

    if compute_dtype is None:
        compute_dtype = feat.dtype                       # do NOT force f32: bf16 halves HBM reads
    feat = feat.astype(compute_dtype)

    predict_offset = wo is not None
    if predict_offset:
        w = jnp.concatenate([wg, wo], axis=0)            # (C+3, D): fuse gaussian + offset heads
        b = jnp.concatenate([bg, bo], axis=0)            # (C+3,)
    else:
        w, b = wg, bg
    Ctot = int(w.shape[0])
    w_t = w.T.astype(compute_dtype)                      # (D, Ctot)
    b2 = b[None, :].astype(jnp.float32)                  # (1, Ctot)

    # Token tiling (TN multiple of 8 sublanes); pad N so TN | Np; padded rows are sliced off.
    Nr = _round_up(N, 8)
    TN = max(8, (min(int(token_tile), Nr) // 8) * 8)
    Np = _round_up(N, TN)
    if Np != N:
        feat = jnp.pad(feat, ((0, 0), (0, Np - N), (0, 0)))

    kernel = functools.partial(_linear_head_kernel,
                               splits=tuple(int(s) for s in split_dims),
                               scale_lambda=float(cfg["scale_lambda"]))

    in_bytes = jnp.dtype(compute_dtype).itemsize
    cost = pl.CostEstimate(
        flops=2 * B * Np * D * Ctot,
        transcendentals=B * Np * (Ctot + 2),             # exp tile + recip + rsqrt
        bytes_accessed=B * Np * D * in_bytes + D * Ctot * in_bytes + B * Np * Ctot * 4,
    )

    fused = pl.pallas_call(
        kernel,
        out_shape=jax.ShapeDtypeStruct((B, Np, Ctot), jnp.float32),
        grid=(B, Np // TN),
        in_specs=[
            pl.BlockSpec((1, TN, D), lambda bb, t: (bb, t, 0)),    # feat token tile
            pl.BlockSpec((D, Ctot), lambda bb, t: (0, 0)),         # fused weight^T (resident)
            pl.BlockSpec((1, Ctot), lambda bb, t: (0, 0)),         # fused bias (resident)
        ],
        out_specs=pl.BlockSpec((1, TN, Ctot), lambda bb, t: (bb, t, 0)),
        compiler_params=pltpu.CompilerParams(
            dimension_semantics=("parallel", "parallel"),          # fine-grained v7x megacore sharding
            vmem_limit_bytes=32 * 1024 * 1024,
        ),
        cost_estimate=cost,
    )(feat, w_t, b2)

    fused = fused[:, :N, :]
    # TODO(synk): if profiling ever shows the store slot (vst.msk on the 23-wide output) as the
    # bottleneck, emit a lane-dense flat (B, Np*Ctot) output and reinterpret here instead.

    c = np.cumsum([0] + list(split_dims))
    out = {
        "gauss_opacity":     fused[:, :, c[0]:c[1]],                    # (B, N, 1)
        "gauss_scaling":     fused[:, :, c[1]:c[2]],                    # (B, N, 3)
        "gauss_rotation":    fused[:, :, c[2]:c[3]],                    # (B, N, 4)
        "gauss_features_dc": fused[:, :, c[3]:c[4]][:, :, None, :],     # (B, N, 1, 3)
    }
    if len(split_dims) > 4:                              # only when max_sh_degree > 0
        out["gauss_features_rest"] = fused[:, :, c[4]:c[5]]             # (B, N, sh_rgb)
    if predict_offset:
        out["gauss_offset"] = fused[:, :, C:C + 3]                      # (B, N, 3)
    return out


# -----------------------------------------------------------------------------
# Pure-JAX reference for correctness.
def reference_forward(feat, wg, bg, wo, bo, cfg, split_dims):
    if feat.ndim == 2:
        feat = feat[None]
    x = feat.astype(jnp.float32)
    g = x @ wg.T + bg
    c = np.cumsum([0] + list(split_dims))
    rot = g[..., c[2]:c[3]]
    rot = rot / jnp.maximum(jnp.linalg.norm(rot, axis=-1, keepdims=True), 1e-12)
    out = {
        "gauss_opacity":     jax.nn.sigmoid(g[..., c[0]:c[1]]),
        "gauss_scaling":     jnp.exp(g[..., c[1]:c[2]]) * cfg["scale_lambda"],
        "gauss_rotation":    rot,
        "gauss_features_dc": g[..., c[3]:c[4]][:, :, None, :],
    }
    if len(split_dims) > 4:
        out["gauss_features_rest"] = g[..., c[4]:c[5]]
    if wo is not None:
        out["gauss_offset"] = x @ wo.T + bo
    return out


if __name__ == "__main__":
    split_dims, scales, biases = get_splits_and_inits(CFG)

    B = 2
    s = CFG["gaussians_per_pixel"]
    n_pix = 8
    N = s * n_pix            # 16 tokens
    D = 32                   # in_dims=[32]

    key = jax.random.PRNGKey(0)
    kf, kp, kf2 = jax.random.split(key, 3)
    feat = jax.random.normal(kf, (B, N, D), jnp.float32)
    wg, bg, wo, bo = init_params(kp, D, split_dims, scales, biases)

    def check(out, ref, rtol, atol):
        assert set(out.keys()) == set(ref.keys())
        for k in out:
            np.testing.assert_allclose(np.asarray(out[k], np.float32),
                                       np.asarray(ref[k], np.float32),
                                       rtol=rtol, atol=atol, err_msg=k)

    # 1) f32 feat path (tolerance accounts for approx EUP reciprocal / rsqrt).
    out = linear_head_forward(feat, wg, bg, wo, bo, CFG, split_dims)
    jax.block_until_ready(out)
    check(out, reference_forward(feat, wg, bg, wo, bo, CFG, split_dims), 2e-3, 2e-3)

    # 2) bf16 feat path (halved HBM reads) with a tiny token tile to exercise token tiling.
    feat_bf = feat.astype(jnp.bfloat16)
    out_bf = linear_head_forward(feat_bf, wg, bg, wo, bo, CFG, split_dims, token_tile=8)
    jax.block_until_ready(out_bf)
    check(out_bf, reference_forward(feat_bf, wg, bg, wo, bo, CFG, split_dims), 5e-2, 5e-2)

    # 3) ragged token count -> exercises pad + tail slicing.
    N2 = 20
    feat2 = jax.random.normal(kf2, (B, N2, D), jnp.float32)
    out2 = linear_head_forward(feat2, wg, bg, wo, bo, CFG, split_dims, token_tile=8)
    jax.block_until_ready(out2)
    check(out2, reference_forward(feat2, wg, bg, wo, bo, CFG, split_dims), 2e-3, 2e-3)

    print("KERNEL_OK")
</pallas_src>

<mosaic_0001>
module attributes {stable_mosaic.version = 11 : i64} {
  func.func @_linear_head_kernel(%arg0: i32, %arg1: i32, %arg2: memref<1x16x32xf32, #tpu.memory_space<vmem>>, %arg3: memref<32x23xf32, #tpu.memory_space<vmem>>, %arg4: memref<1x23xf32, #tpu.memory_space<vmem>>, %arg5: memref<1x16x23xf32, #tpu.memory_space<vmem>>) attributes {dimension_semantics = [#tpu.dimension_semantics<parallel>, #tpu.dimension_semantics<parallel>], iteration_bounds = array<i64: 2, 1>, scalar_prefetch = 0 : i64, scratch_operands = 0 : i64, tpu.core_type = #tpu.core_type<tc>, window_params = [{transform_indices = @transform_0, window_bounds = array<i64: 1, 16, 32>}, {pipeline_mode = #tpu.pipeline_mode<synchronous>, transform_indices = @transform_1, window_bounds = array<i64: 32, 23>}, {pipeline_mode = #tpu.pipeline_mode<synchronous>, transform_indices = @transform_2, window_bounds = array<i64: 1, 23>}, {transform_indices = @transform_3, window_bounds = array<i64: 1, 16, 23>}]} {
    %c0 = arith.constant 0 : index
    %c0_0 = arith.constant 0 : index
    %c0_1 = arith.constant 0 : index
    %0 = vector.load %arg2[%c0, %c0_0, %c0_1] : memref<1x16x32xf32, #tpu.memory_space<vmem>>, vector<1x16x32xf32>
    %1 = vector.shape_cast %0 : vector<1x16x32xf32> to vector<16x32xf32>
    %c0_2 = arith.constant 0 : index
    %c0_3 = arith.constant 0 : index
    %2 = vector.load %arg3[%c0_2, %c0_3] : memref<32x23xf32, #tpu.memory_space<vmem>>, vector<32x23xf32>
    %cst = arith.constant dense<0.000000e+00> : vector<16x23xf32>
    %3 = tpu.matmul %1, %2, %cst {dimension_numbers = #tpu.dot_dimension_numbers<[1], [0], [0], [1], [0, 0, 1, 1], [], []>} : vector<16x32xf32>, vector<32x23xf32>, vector<16x23xf32> -> vector<16x23xf32>
    %c0_4 = arith.constant 0 : index
    %c0_5 = arith.constant 0 : index
    %4 = vector.load %arg4[%c0_4, %c0_5] : memref<1x23xf32, #tpu.memory_space<vmem>>, vector<1x23xf32>
    %5 = vector.broadcast %4 : vector<1x23xf32> to vector<16x23xf32>
    %6 = arith.addf %3, %5 : vector<16x23xf32>
    %7 = tpu.iota {dimensions = array<i32: 1>} : vector<16x23xi32>
    %c1_i32 = arith.constant 1 : i32
    %8 = vector.broadcast %c1_i32 : i32 to vector<16x23xi32>
    %9 = arith.cmpi slt, %7, %8 : vector<16x23xi32>
    %c1_i32_6 = arith.constant 1 : i32
    %10 = vector.broadcast %c1_i32_6 : i32 to vector<16x23xi32>
    %11 = arith.cmpi sge, %7, %10 : vector<16x23xi32>
    %c4_i32 = arith.constant 4 : i32
    %12 = vector.broadcast %c4_i32 : i32 to vector<16x23xi32>
    %13 = arith.cmpi slt, %7, %12 : vector<16x23xi32>
    %14 = arith.andi %11, %13 : vector<16x23xi1>
    %c4_i32_7 = arith.constant 4 : i32
    %15 = vector.broadcast %c4_i32_7 : i32 to vector<16x23xi32>
    %16 = arith.cmpi sge, %7, %15 : vector<16x23xi32>
    %c8_i32 = arith.constant 8 : i32
    %17 = vector.broadcast %c8_i32 : i32 to vector<16x23xi32>
    %18 = arith.cmpi slt, %7, %17 : vector<16x23xi32>
    %19 = arith.andi %16, %18 : vector<16x23xi1>
    %cst_8 = arith.constant 8.000000e+01 : f32
    %20 = vector.broadcast %cst_8 : f32 to vector<16x23xf32>
    %21 = arith.minimumf %6, %20 : vector<16x23xf32>
    %22 = math.exp %21 : vector<16x23xf32>
    %cst_9 = arith.constant 1.000000e+00 : f32
    %23 = vector.broadcast %cst_9 : f32 to vector<16x23xf32>
    %24 = arith.addf %23, %22 : vector<16x23xf32>
    %25 = tpu.reciprocal %24 {approx = true} : vector<16x23xf32> -> vector<16x23xf32>
    %26 = arith.mulf %22, %25 : vector<16x23xf32>
    %27 = arith.mulf %6, %6 : vector<16x23xf32>
    %cst_10 = arith.constant 0.000000e+00 : f32
    %28 = vector.broadcast %cst_10 : f32 to vector<16x23xf32>
    %29 = arith.select %19, %27, %28 : vector<16x23xi1>, vector<16x23xf32>
    %cst_11 = arith.constant dense<0.000000e+00> : vector<16xf32>
    %30 = vector.multi_reduction <add>, %29, %cst_11 [1] : vector<16x23xf32> to vector<16xf32>
    %31 = vector.shape_cast %30 : vector<16xf32> to vector<16x1xf32>
    %cst_12 = arith.constant 1.000000e-24 : f32
    %32 = vector.broadcast %cst_12 : f32 to vector<16x1xf32>
    %33 = arith.maximumf %31, %32 : vector<16x1xf32>
    %34 = math.rsqrt %33 : vector<16x1xf32>
    %cst_13 = arith.constant 1.000000e+00 : f32
    %35 = vector.broadcast %cst_13 : f32 to vector<16x23xf32>
    %36 = arith.mulf %22, %35 : vector<16x23xf32>
    %37 = vector.broadcast %34 : vector<16x1xf32> to vector<16x23xf32>
    %38 = arith.mulf %6, %37 : vector<16x23xf32>
    %39 = arith.select %19, %38, %6 : vector<16x23xi1>, vector<16x23xf32>
    %40 = arith.select %14, %36, %39 : vector<16x23xi1>, vector<16x23xf32>
    %41 = arith.select %9, %26, %40 : vector<16x23xi1>, vector<16x23xf32>
    %c0_14 = arith.constant 0 : index
    %c0_15 = arith.constant 0 : index
    %c0_16 = arith.constant 0 : index
    %42 = vector.load %arg5[%c0_14, %c0_15, %c0_16] : memref<1x16x23xf32, #tpu.memory_space<vmem>>, vector<1x16x23xf32>
    %43 = vector.shape_cast %42 : vector<1x16x23xf32> to vector<16x23xf32>
    %44 = vector.shape_cast %41 : vector<16x23xf32> to vector<1x16x23xf32>
    tpu.vector_store %arg5[%c0_14, %c0_15, %c0_16], %44 {strides = array<i32>} : memref<1x16x23xf32, #tpu.memory_space<vmem>>, vector<1x16x23xf32>,
    return
  }
  func.func @transform_0(%arg0: i32, %arg1: i32) -> (i32, i32, i32) {
    %c0_i32 = arith.constant 0 : i32
    %c0_i32_0 = arith.constant 0 : i32
    return %arg0, %arg1, %c0_i32 : i32, i32, i32
  }
  func.func @transform_1(%arg0: i32, %arg1: i32) -> (i32, i32) {
    %c0_i32 = arith.constant 0 : i32
    %c0_i32_0 = arith.constant 0 : i32
    %c0_i32_1 = arith.constant 0 : i32
    return %c0_i32, %c0_i32_0 : i32, i32
  }
  func.func @transform_2(%arg0: i32, %arg1: i32) -> (i32, i32) {
    %c0_i32 = arith.constant 0 : i32
    %c0_i32_0 = arith.constant 0 : i32
    %c0_i32_1 = arith.constant 0 : i32
    return %c0_i32, %c0_i32_0 : i32, i32
  }
  func.func @transform_3(%arg0: i32, %arg1: i32) -> (i32, i32, i32) {
    %c0_i32 = arith.constant 0 : i32
    %c0_i32_0 = arith.constant 0 : i32
    return %arg0, %arg1, %c0_i32 : i32, i32, i32
  }
}

</mosaic_0001>

<llo_original>
// kernel: tpu_custom_call.1
$region0: #{tpu_custom_call.1}
  #allocation0 [shape = 'u32[]', space=smem, size = 0x4, offset = 0x4, fixed_abs, tag = 'smem constant byte address 0x4 - core index']
  #allocation1 [shape = 'u32[72,128]{1,0:T(1,128)}', space=vmem, size = 0x9000, scoped, tag = 'internal scratch']
  %s0 = inlined_call_operand.vmem [shape: f32[2,16,32], index: 0, kind: input, shape index: {}]
  %s1 = inlined_call_operand.vmem [shape: f32[32,23], index: 1, kind: input, shape index: {}]
  %s2 = inlined_call_operand.vmem [shape: f32[1,23], index: 2, kind: input, shape index: {}]
  %s3 = inlined_call_operand.hbm [shape: f32[2,16,23], index: 3, kind: output, shape index: {}]
  %s4 = sld [smem:[#allocation0]]
  $region45: #{tpu_custom_call.1} parent=0
    _
  %s6 = ssub.s32 1, %s4
  %s7 = scalar_select 0, %s6, %s4
  $region1: #{tpu_custom_call.1} parent=0
    #allocation2 [shape = 'u8[16384]{0}', space=vmem, size = 0x4000, scoped, tag = 'output window, operand 0']
    #allocation3 [shape = 's32[2]{0}', space=sflag, size = 0x8, scoped, tag = 'scoped memory for tpu_custom_call.1']
    %8 = vsyncpa [#allocation3], 0
    %s9 = scalar_lea.sflag [#allocation3], 1
    %10 = vsyncpa %s9, 0
    loop: start=0, step=1, limit=4
    $region2: #{tpu_custom_call.1} parent=1 // loop_pre_header
      _
    $region3: #{tpu_custom_call.1} parent=1 // loop_header
      %s12 = sphi 0, %s16
      %p13 = scmp.ge.s32.totalorder %s12, 4
      %s19 = sphi 0, %s31
      %s20 = sphi 0, %s27
      %s21 = sphi 0, %s19
      %s22 = sphi 0, %s20
      %s23 = sphi 0, %s21
      %s24 = sphi 0, %s22
      %s36 = sphi 0, %s38
      %s39 = sphi 0, %s36
      %s40 = sphi 0, %s39
      %s56 = sphi 0, %s40
      %s60 = sphi 0, %s60
      %s62 = sphi 0, %s60
      %s63 = sphi 0, %s62
      %s77 = sphi 0, %s63
      %s81 = sphi 0, %s81
      %s83 = sphi 0, %s81
      %s84 = sphi 0, %s83
      %s98 = sphi 0, %s84
      %s106 = sphi 0, %s108
      %s109 = sphi 0, %s106
      %s110 = sphi 0, %s109
      %s126 = sphi 0, %s110
    $region4: #{tpu_custom_call.1} parent=1 // loop_header_branch
      %15 = sbr.rel (%p13) target = $region8
    $region5: #{tpu_custom_call.1} parent=1 // loop_body
      %s17 = ssub.s32 %s12, 1
      %s18 = ssub.s32 %s12, 2
      %s25 = sadd.s32 1, %s20
      %p26 = scmp.ge.s32.totalorder %s25, 1
      %s27 = scalar_select %p26, 0, %s25
      %s28 = sadd.s32 1, %s19
      %s29 = scalar_select %p26, %s28, %s19
      %p30 = scmp.ge.s32.totalorder %s29, 2
      %s31 = scalar_select %p30, 0, %s29
      %s32 = ssub.s32 %s19, %s31
      %s33 = ssub.s32 %s20, %s27
      %s34 = sor.u32 %s32, %s33
      %p35 = scmp.eq.s32.totalorder %s34, 0
      %s37 = sadd.s32 %s36, 1
      %s38 = scalar_select %p35, %s36, %s37
      %p41 = pneg %p35
      %p42 = scmp.eq.s32.totalorder %s12, 1
      %p43 = por %p41, %p42
      %p44 = scmp.ne.s32.totalorder %s36, %s39
      %p45 = scmp.eq.s32.totalorder %s12, 0
      %p46 = por %p44, %p45
      %p47 = scmp.ne.s32.totalorder %s36, %s39
      %p48 = scmp.eq.s32.totalorder %s17, 1
      %p49 = por %p47, %p48
      %p50 = scmp.ne.s32.totalorder %s39, %s40
      %p51 = scmp.eq.s32.totalorder %s17, 0
      %p52 = por %p50, %p51
      %p53 = scmp.ne.s32.totalorder %s39, %s40
      %p54 = scmp.eq.s32.totalorder %s18, 1
      %p55 = por %p53, %p54
      %p57 = scmp.ne.s32.totalorder %s40, %s56
      %p58 = scmp.eq.s32.totalorder %s18, 0
      %p59 = por %p57, %p58
      %s61 = sadd.s32 %s60, 1
      %p64 = scmp.eq.s32.totalorder %s12, 1
      %p65 = scmp.ne.s32.totalorder %s60, %s62
      %p66 = scmp.eq.s32.totalorder %s12, 0
      %p67 = por %p65, %p66
      %p68 = scmp.ne.s32.totalorder %s60, %s62
      %p69 = scmp.eq.s32.totalorder %s17, 1
      %p70 = por %p68, %p69
      %p71 = scmp.ne.s32.totalorder %s62, %s63
      %p72 = scmp.eq.s32.totalorder %s17, 0
      %p73 = por %p71, %p72
      %p74 = scmp.ne.s32.totalorder %s62, %s63
      %p75 = scmp.eq.s32.totalorder %s18, 1
      %p76 = por %p74, %p75
      %p78 = scmp.ne.s32.totalorder %s63, %s77
      %p79 = scmp.eq.s32.totalorder %s18, 0
      %p80 = por %p78, %p79
      %s82 = sadd.s32 %s81, 1
      %p85 = scmp.eq.s32.totalorder %s12, 1
      %p86 = scmp.ne.s32.totalorder %s81, %s83
      %p87 = scmp.eq.s32.totalorder %s12, 0
      %p88 = por %p86, %p87
      %p89 = scmp.ne.s32.totalorder %s81, %s83
      %p90 = scmp.eq.s32.totalorder %s17, 1
      %p91 = por %p89, %p90
      %p92 = scmp.ne.s32.totalorder %s83, %s84
      %p93 = scmp.eq.s32.totalorder %s17, 0
      %p94 = por %p92, %p93
      %p95 = scmp.ne.s32.totalorder %s83, %s84
      %p96 = scmp.eq.s32.totalorder %s18, 1
      %p97 = por %p95, %p96
      %p99 = scmp.ne.s32.totalorder %s84, %s98
      %p100 = scmp.eq.s32.totalorder %s18, 0
      %p101 = por %p99, %p100
      %s102 = ssub.s32 %s19, %s31
      %s103 = ssub.s32 %s20, %s27
      %s104 = sor.u32 %s102, %s103
      %p105 = scmp.eq.s32.totalorder %s104, 0
      %s107 = sadd.s32 %s106, 1
      %s108 = scalar_select %p105, %s106, %s107
      %p111 = pneg %p105
      %p112 = scmp.eq.s32.totalorder %s12, 1
      %p113 = por %p111, %p112
      %p114 = scmp.ne.s32.totalorder %s106, %s109
      %p115 = scmp.eq.s32.totalorder %s12, 0
      %p116 = por %p114, %p115
      %p117 = scmp.ne.s32.totalorder %s106, %s109
      %p118 = scmp.eq.s32.totalorder %s17, 1
      %p119 = por %p117, %p118
      %p120 = scmp.ne.s32.totalorder %s109, %s110
      %p121 = scmp.eq.s32.totalorder %s17, 0
      %p122 = por %p120, %p121
      %p123 = scmp.ne.s32.totalorder %s109, %s110
      %p124 = scmp.eq.s32.totalorder %s18, 1
      %p125 = por %p123, %p124
      %p127 = scmp.ne.s32.totalorder %s110, %s126
      %p128 = scmp.eq.s32.totalorder %s18, 0
      %p129 = por %p127, %p128
      %p130 = scmp.le.s32.totalorder 1, %s12
      %p131 = scmp.lt.s32.totalorder %s12, 3
      %p132 = pnand %p130, %p131
      %p133 = pneg %p132
      // Predicated region
      $region9: #{tpu_custom_call.1} parent=5 // pred_check
        _
      $region10: #{tpu_custom_call.1} parent=5 // pred_check_branch
        %135 = sbr.rel (%p132) target = $region12
      $region11: #{tpu_custom_call.1} parent=5 // pred_region
        %s136 = ssub.s32 %s12, 1
        // Predicated region
        $region13: #{tpu_custom_call.1} parent=11 // pred_check
          %p137 = pneg %p73
        $region14: #{tpu_custom_call.1} parent=11 // pred_check_branch
          %139 = sbr.rel (%p137) target = $region16
        $region15: #{tpu_custom_call.1} parent=11 // pred_region
          _
        $region16: #{tpu_custom_call.1} parent=11 // pred_fallthru
          _
        // Predicated region
        $region17: #{tpu_custom_call.1} parent=11 // pred_check
          %p140 = pneg %p94
        $region18: #{tpu_custom_call.1} parent=11 // pred_check_branch
          %142 = sbr.rel (%p140) target = $region20
        $region19: #{tpu_custom_call.1} parent=11 // pred_region
          _
        $region20: #{tpu_custom_call.1} parent=11 // pred_fallthru
          _
      $region12: #{tpu_custom_call.1} parent=5 // pred_fallthru
        _
      %p143 = scmp.lt.s32.totalorder %s12, 2
      // Predicated region
      $region21: #{tpu_custom_call.1} parent=5 // pred_check
        %p144 = pneg %p143
      $region22: #{tpu_custom_call.1} parent=5 // pred_check_branch
        %146 = sbr.rel (%p144) target = $region24
      $region23: #{tpu_custom_call.1} parent=5 // pred_region
        // Predicated region
        $region25: #{tpu_custom_call.1} parent=23 // pred_check
          %p147 = pneg %p46
        $region26: #{tpu_custom_call.1} parent=23 // pred_check_branch
          %149 = sbr.rel (%p147) target = $region28
        $region27: #{tpu_custom_call.1} parent=23 // pred_region
          %s150 = smul.u32 2, %s20
          %p151 = scmp.lt.s32.totalorder %s19, 1
          %s152 = scalar_select %p151, %s19, 1
          %p153 = scmp.lt.s32.totalorder %s150, 1
          %s154 = scalar_select %p153, %s150, 1
          %s155 = smul.addr %s152, 2
          %s156 = sadd.s32 %s154, %s155
          %s157 = smul.addr %s156, 8
          %s158 = scalar_lea.vmem %s0, %s157
          %s159 = smul.u32 2, %s20
        $region28: #{tpu_custom_call.1} parent=23 // pred_fallthru
          _
      $region24: #{tpu_custom_call.1} parent=5 // pred_fallthru
        _
      %p160 = scmp.le.s32.totalorder 1, %s12
      %p161 = scmp.lt.s32.totalorder %s12, 3
      %p162 = pnand %p160, %p161
      %p163 = pneg %p162
      // Predicated region
      $region29: #{tpu_custom_call.1} parent=5 // pred_check
        _
      $region30: #{tpu_custom_call.1} parent=5 // pred_check_branch
        %165 = sbr.rel (%p162) target = $region32
      $region31: #{tpu_custom_call.1} parent=5 // pred_region
        %s166 = ssub.s32 %s12, 1
        %s167 = smul.u32 2, %s22
        %p168 = scmp.lt.s32.totalorder %s21, 1
        %s169 = scalar_select %p168, %s21, 1
        %p170 = scmp.lt.s32.totalorder %s167, 1
        %s171 = scalar_select %p170, %s167, 1
        %s172 = smul.addr %s169, 2
        %s173 = sadd.s32 %s171, %s172
        %s174 = smul.addr %s173, 8
        %s175 = scalar_lea.vmem %s0, %s174
        %p176 = pneg %p52
        %p177 = pneg %p49
        %p178 = pneg %p73
        %p179 = pneg %p70
        %p180 = pneg %p94
        %p181 = pneg %p91
        %p182 = pneg %p122
        %p183 = pneg %p119
        %s184 = sand.u32 %s109, 1
        %s185 = scalar_lea.sflag [#allocation3], %s184
        %s186 = sand.u32 %s109, 1
        %s187 = smul.addr %s186, 16
        %s188 = scalar_lea.vmem [#allocation2], %s187
        %s189 = smul.u32 2, %s22
        %p190 = scmp.lt.s32.totalorder %s21, 1
        %s191 = scalar_select %p190, %s21, 1
        %p192 = scmp.lt.s32.totalorder %s189, 1
        %s193 = scalar_select %p192, %s189, 1
        %s194 = smul.addr %s191, 2
        %s195 = sadd.s32 %s193, %s194
        %s196 = smul.addr %s195, 8
        %s197 = scalar_lea.vmem %s0, %s196
        %s198 = smul.u32 2, %s22
        %s199 = smul.u32 2, %s22
        %v200 = vld [vmem:[%s197] sm:$0xff]
        %v201 = vld [vmem:[%s197 + $0x8] sm:$0xff]
        %v202 = vld [vmem:[%s1] sm:$0xff]
        %v203 = vld [vmem:[%s1 + $0x8] sm:$0xff]
        %v204 = vld [vmem:[%s1 + $0x10] sm:$0xff]
        %v205 = vld [vmem:[%s1 + $0x18] sm:$0xff]
        %v206 = vld [vmem:[%s2] sm:$0x1]
        %v208 = vperm.slane %v206, 0
        %vm210 = vcmask 261120
        %v212 = vsel %vm210, %v200, 0
        %v215 = vsel %vm210, %v201, 0
        %217 = vmatpush.msra.mxu0 0.0
        %218 = vmatpush.msra.mxu0 0.0
        %219 = vmatpush.msra.mxu0 0.0
        %220 = vmatpush.msra.mxu0 0.0
        %221 = vmatpush.msra.mxu0 0.0
        %222 = vmatpush.msra.mxu0 0.0
        %223 = vmatpush.msra.mxu0 0.0
        %224 = vmatpush.msra.mxu0 0.0
        %225 = vmatpush.msra.mxu0 0.0
        %226 = vmatpush.msra.mxu0 0.0
        %227 = vmatpush.msra.mxu0 0.0
        %228 = vmatpush.msra.mxu0 0.0
        %229 = vmatpush.msra.mxu0 %v205
        %230 = vmatpush.msra.mxu0 %v204
        %231 = vmatpush.msra.mxu0 %v203
        %232 = vmatpush.msra.mxu0 %v202
        %233 = vmatmul.f32.gmra.mxu0 %v212
        %v234 = vpop.f32.mrf.mxu0
        %v235 = vadd.f32 %v208, %v234
        %236 = vmatmul.f32.gmra.mxu0 %v215
        %v237 = vpop.f32.mrf.mxu0
        %v238 = vadd.f32 %v208, %v237
        %239 = vdwg.mxu0
        %v240 = vlaneseq
        %v241 = vand.u32 %v240, 127
        %vm242 = vcmp.lt.s32.totalorder %v241, 1
        %vm243 = vcmp.ge.s32.totalorder %v241, 1
        %vm244 = vcmp.lt.s32.totalorder %v241, 4
        %vm245 = vmand %vm243, %vm244
        %vm246 = vcmp.ge.s32.totalorder %v241, 4
        %vm247 = vcmp.lt.s32.totalorder %v241, 8
        %vm248 = vmand %vm246, %vm247
        %v249 = vmin.f32 %v235, 80.0
        %v250 = vmin.f32 %v238, 80.0
        %v251 = vmul.f32 %v249, 1.442695
        %v252 = vpow.pop %v251
        %v253 = vmul.f32 %v250, 1.442695
        %v254 = vpow.pop %v253
        %v255 = vadd.f32 %v252, 1.0
        %v256 = vadd.f32 %v254, 1.0
        %v257 = vrcp.pop %v255
        %v258 = vrcp.pop %v256
        %v259 = vmul.f32 %v252, %v257
        %v260 = vmul.f32 %v254, %v258
        %v261 = vmul.f32 %v235, %v235
        %v262 = vmul.f32 %v238, %v238
        %v263 = vsel %vm248, %v261, 0.0
        %v264 = vsel %vm248, %v262, 0.0
        %vm265 = vcmask 187392
        %v266 = vsel %vm265, %v263, 0.0
        %267 = vadd.xlane.f32.xlu0 %v266
        %v268 = vpop.xlane.xlu0 %267
        %v269 = vsel %vm265, %v264, 0.0
        %270 = vadd.xlane.f32.xlu0 %v269
        %v271 = vpop.xlane.xlu0 %270
        %v272 = vmax.f32 %v268, 1e-24
        %v273 = vmax.f32 %v271, 1e-24
        %v274 = vrsqrt.pop %v272
        %v275 = vmul.f32 %v274, %v272
        %v276 = vmul.f32 %v275, %v274
        %v277 = vmul.f32 0.5, %v276
        %v278 = vsub.f32 1.5, %v277
        %v279 = vmul.f32 %v274, %v278
        %vm280 = vweird.f32 %v272
        %vm281 = vweird.f32 %v274
        %vm282 = vmor %vm280, %vm281
        %v283 = vsel %vm282, %v274, %v279
        %v284 = vrsqrt.pop %v273
        %v285 = vmul.f32 %v284, %v273
        %v286 = vmul.f32 %v285, %v284
        %v287 = vmul.f32 0.5, %v286
        %v288 = vsub.f32 1.5, %v287
        %v289 = vmul.f32 %v284, %v288
        %vm290 = vweird.f32 %v273
        %vm291 = vweird.f32 %v284
        %vm292 = vmor %vm290, %vm291
        %v293 = vsel %vm292, %v284, %v289
        %v294 = vmul.f32 %v235, %v283
        %v295 = vmul.f32 %v238, %v293
        %v296 = vsel %vm248, %v294, %v235
        %v297 = vsel %vm248, %v295, %v238
        %v298 = vsel %vm245, %v252, %v296
        %v299 = vsel %vm245, %v254, %v297
        %v300 = vsel %vm242, %v259, %v298
        %v301 = vsel %vm242, %v260, %v299
        %302 = vst.msk [vmem:[%s188] sm:$0xff] %vm265, %v300
        %303 = vst.msk [vmem:[%s188 + $0x8] sm:$0xff] %vm265, %v301
        %s304 = sand.u32 %s109, 1
        %s305 = scalar_lea.sflag [#allocation3], %s304
        %s306 = sand.u32 %s109, 1
        %s307 = smul.addr %s306, 16
        %s308 = scalar_lea.vmem [#allocation2], %s307
        // Predicated region
        $region33: #{tpu_custom_call.1} parent=31 // pred_check
          %p309 = pneg %p119
        $region34: #{tpu_custom_call.1} parent=31 // pred_check_branch
          %311 = sbr.rel (%p309) target = $region36
        $region35: #{tpu_custom_call.1} parent=31 // pred_region
          %s312 = smul.u32 2, %s22
          %314 = vsyncadd %s305, 0
          %s315 = smul.addr %s21, 2
          %s316 = sadd.s32 %s312, %s315
          %s317 = smul.addr %s316, 8
          %s318 = scalar_lea.hbm %s3, %s317
          %s319 = sshll.u32 %s308, 4
          %s320 = int_to_ptr.vmem [resolvable:$true] %s319
          %s321 = sshll.u32 %s318, 4
          %s322 = int_to_ptr.hbm [resolvable:$true] %s321
          %327 = dma.vmem_to_hbm [thread:$0]  %s320, 256, %s322, %s305, 128, 128, 8
        $region36: #{tpu_custom_call.1} parent=31 // pred_fallthru
          _
      $region32: #{tpu_custom_call.1} parent=5 // pred_fallthru
        _
      %p328 = scmp.le.s32.totalorder 2, %s12
      // Predicated region
      $region37: #{tpu_custom_call.1} parent=5 // pred_check
        %p329 = pneg %p328
      $region38: #{tpu_custom_call.1} parent=5 // pred_check_branch
        %331 = sbr.rel (%p329) target = $region40
      $region39: #{tpu_custom_call.1} parent=5 // pred_region
        %s332 = ssub.s32 %s12, 2
        // Predicated region
        $region41: #{tpu_custom_call.1} parent=39 // pred_check
          %p333 = pneg %p125
        $region42: #{tpu_custom_call.1} parent=39 // pred_check_branch
          %335 = sbr.rel (%p333) target = $region44
        $region43: #{tpu_custom_call.1} parent=39 // pred_region
          %s336 = sand.u32 %s110, 1
          %s337 = scalar_lea.sflag [#allocation3], %s336
          %s338 = sand.u32 %s110, 1
          %s339 = smul.addr %s338, 16
          %s340 = scalar_lea.vmem [#allocation2], %s339
          %342 = dma.done %s337, 256
        $region44: #{tpu_custom_call.1} parent=39 // pred_fallthru
          _
      $region40: #{tpu_custom_call.1} parent=5 // pred_fallthru
        _
    $region6: #{tpu_custom_call.1} parent=1 // loop_footer
      %s16 = sadd.s32 1, %s12
    $region7: #{tpu_custom_call.1} parent=1 // loop_footer_branch
      %11 = sbr.rel target = $region3
    $region8: #{tpu_custom_call.1} parent=1 // loop_exit
      _
    %343 = vsyncpa [#allocation3], 1
    %s344 = scalar_lea.sflag [#allocation3], 1
    %345 = vsyncpa %s344, 1

</llo_original>
